<compile_context>
chip_gen: v5e
topology: v5e:2x2
jax: 0.10.0
libtpu: 0.0.40
codegen_flags: <defaults>
</compile_context>

<pallas_src>
import jax
import jax.numpy as jnp
from jax.experimental import pallas as pl
from jax.experimental.pallas import tpu as pltpu


def _rup(n, m):
    return ((n + m - 1) // m) * m


def build_fusion_forward(num_nodes, node_feature_dim, sigma_input_dim, hidden_dim):
    """Returns (prepare_params, forward).

    prepare_params(params) -> packed f32 parameter slab   (run ONCE at init)
    forward(adj, x, sigma, slab) -> scalar                 (jitted per-call path)
    """
    N, F, S, H = num_nodes, node_feature_dim, sigma_input_dim, hidden_dim
    TWO_H = 2 * H
    WCOL = _rup(max(H, TWO_H, F, S, N, 1), 128)        # lane-dense slab width

    # 8-row-aligned offsets inside the packed parameter slab.
    R_W1 = 0
    R_W2 = R_W1 + _rup(F, 8)
    R_W3 = R_W2 + _rup(H, 8)
    R_WF1 = R_W3 + _rup(H, 8)
    R_WF2 = R_WF1 + _rup(S, 8)
    R_VEC = R_WF2 + _rup(TWO_H, 8)
    R_TOTAL = R_VEC + 8

    def prepare_params(p):
        """One-time prep: fold BN affine + 1/N, pack everything into one slab."""
        w1 = p["w1"] * p["s1"]
        b1 = p["b1"] * p["s1"] + p["t1"]
        w2 = p["w2"] * p["s2"]
        b2 = p["b2"] * p["s2"] + p["t2"]
        w3 = p["w3"] * p["s3"]
        b3 = p["b3"] * p["s3"] + p["t3"]
        wg = p["wfc_g"].T / N                 # (1,H); global_mean_pool 1/N folded in
        wf = p["wfc_f"].T                     # (1,H)

        slab = jnp.zeros((R_TOTAL, WCOL), jnp.float32)
        slab = slab.at[R_W1:R_W1 + F, :H].set(w1)
        slab = slab.at[R_W2:R_W2 + H, :H].set(w2)
        slab = slab.at[R_W3:R_W3 + H, :H].set(w3)
        slab = slab.at[R_WF1:R_WF1 + S, :TWO_H].set(p["wf1"])
        slab = slab.at[R_WF2:R_WF2 + TWO_H, :H].set(p["wf2"])
        slab = slab.at[R_VEC + 0, :H].set(b1[0])
        slab = slab.at[R_VEC + 1, :H].set(b2[0])
        slab = slab.at[R_VEC + 2, :H].set(b3[0])
        slab = slab.at[R_VEC + 3, :TWO_H].set(p["bf1"][0])
        slab = slab.at[R_VEC + 4, :H].set(p["bf2"][0])
        slab = slab.at[R_VEC + 5, :H].set(wg[0])          # lane-0 aligned
        slab = slab.at[R_VEC + 6, :H].set(wf[0])          # lane-0 aligned
        slab = slab.at[R_VEC + 7, 0].set(p["bfc"][0, 0])  # fusion bias at lane 0
        return jax.device_put(slab.astype(jnp.float32))

    def kernel(adj_ref, x_ref, sigma_ref, p_ref, out_ref):
        f32 = jnp.float32
        adj = adj_ref[...]

        # Static slices of the packed parameter slab (8-row-aligned, lane 0).
        w1 = p_ref[R_W1:R_W1 + F, :H]
        w2 = p_ref[R_W2:R_W2 + H, :H]
        w3 = p_ref[R_W3:R_W3 + H, :H]
        wf1 = p_ref[R_WF1:R_WF1 + S, :TWO_H]
        wf2 = p_ref[R_WF2:R_WF2 + TWO_H, :H]
        b1 = p_ref[R_VEC + 0:R_VEC + 1, :H]
        b2 = p_ref[R_VEC + 1:R_VEC + 2, :H]
        b3 = p_ref[R_VEC + 2:R_VEC + 3, :H]
        bf1 = p_ref[R_VEC + 3:R_VEC + 4, :TWO_H]
        bf2 = p_ref[R_VEC + 4:R_VEC + 5, :H]
        wg = p_ref[R_VEC + 5:R_VEC + 6, :H]        # fusion weight (GCN emb), /N folded
        wf = p_ref[R_VEC + 6:R_VEC + 7, :H]        # fusion weight (FF emb)
        bfc_row = p_ref[R_VEC + 7:R_VEC + 8, :H]   # fusion bias at lane 0, zeros after

        # ---- GCN layer 1 (BN folded; dropout == identity in eval) --------------
        h = jnp.dot(x_ref[...], w1, preferred_element_type=f32)
        h = jnp.dot(adj, h, preferred_element_type=f32) + b1
        h = jnp.maximum(h, 0.0)
        h_res = h
        # ---- GCN layer 2 (+ residual before ReLU); BN folded --------------------
        h2 = jnp.dot(h, w2, preferred_element_type=f32)
        h2 = jnp.dot(adj, h2, preferred_element_type=f32) + b2
        h2 = jnp.maximum(h2 + h_res, 0.0)
        # ---- GCN layer 3; BN folded ---------------------------------------------
        h3 = jnp.dot(h2, w3, preferred_element_type=f32)
        h3 = jnp.dot(adj, h3, preferred_element_type=f32) + b3
        h3 = jnp.maximum(h3, 0.0)
        # ---- global mean pool: 1/N folded into wg -> plain row-sum (XLU) -------
        gsum = jnp.sum(h3, axis=0, keepdims=True)                  # (1, H)

        # ---- FF branch (independent of GCN chain -> fills MXU bubbles) ---------
        f = jnp.dot(sigma_ref[...], wf1, preferred_element_type=f32) + bf1
        f = jnp.maximum(f, 0.0)
        ff = jnp.dot(f, wf2, preferred_element_type=f32) + bf2
        ff = jnp.maximum(ff, 0.0)                                  # (1, H)

        # ---- fusion head: VPU multiply + lane reduce (no tiny tail matmul) -----
        fused = gsum * wg + ff * wf + bfc_row                      # (1, H)
        total = jnp.sum(fused, axis=1, keepdims=True)              # (1, 1)
        out_ref[...] = jnp.broadcast_to(total, (1, 128))           # lane-dense store

    vmem = pl.BlockSpec(memory_space=pltpu.MemorySpace.VMEM)

    @jax.jit
    def forward(adj, x, sigma, slab):
        out = pl.pallas_call(
            kernel,
            out_shape=jax.ShapeDtypeStruct((1, 128), jnp.float32),
            in_specs=[vmem, vmem, vmem, vmem],
            out_specs=vmem,
        )(adj, x, sigma, slab)
        return out[0, 0]                      # scalar, matches torch .squeeze()

    return prepare_params, forward


def reference_jnp(adj, x, p, sigma):
    """Pure-JAX reference of the original (un-folded) forward."""
    h = adj @ (x @ p["w1"]) + p["b1"]
    h = jnp.maximum(h * p["s1"] + p["t1"], 0.0)
    h_res = h
    h2 = adj @ (h @ p["w2"]) + p["b2"]
    h2 = jnp.maximum(h2 * p["s2"] + p["t2"] + h_res, 0.0)
    h3 = adj @ (h2 @ p["w3"]) + p["b3"]
    h3 = jnp.maximum(h3 * p["s3"] + p["t3"], 0.0)
    g = jnp.mean(h3, axis=0, keepdims=True)
    f = jnp.maximum(sigma @ p["wf1"] + p["bf1"], 0.0)
    f = jnp.maximum(f @ p["wf2"] + p["bf2"], 0.0)
    return jnp.squeeze(g @ p["wfc_g"] + f @ p["wfc_f"] + p["bfc"])


def make_params(key, node_feature_dim, sigma_input_dim, hidden_dim):
    H = hidden_dim
    ks = jax.random.split(key, 26)
    n = lambda k, shape, s=0.1: (s * jax.random.normal(k, shape)).astype(jnp.float32)

    def bn_affine(kg, kb, km, kv):
        gamma = 1.0 + 0.05 * jax.random.normal(kg, (1, H))
        beta = 0.05 * jax.random.normal(kb, (1, H))
        mean = 0.02 * jax.random.normal(km, (1, H))
        var = 1.0 + 0.1 * jnp.abs(jax.random.normal(kv, (1, H)))
        scale = gamma / jnp.sqrt(var + 1e-5)
        shift = beta - mean * scale
        return scale.astype(jnp.float32), shift.astype(jnp.float32)

    s1, t1 = bn_affine(ks[6], ks[7], ks[8], ks[9])
    s2, t2 = bn_affine(ks[10], ks[11], ks[12], ks[13])
    s3, t3 = bn_affine(ks[14], ks[15], ks[16], ks[17])
    return dict(
        w1=n(ks[0], (node_feature_dim, H)), b1=n(ks[3], (1, H)),
        w2=n(ks[1], (H, H)), b2=n(ks[4], (1, H)),
        w3=n(ks[2], (H, H)), b3=n(ks[5], (1, H)),
        s1=s1, t1=t1, s2=s2, t2=t2, s3=s3, t3=t3,
        wf1=n(ks[18], (sigma_input_dim, 2 * H)), bf1=n(ks[19], (1, 2 * H)),
        wf2=n(ks[20], (2 * H, H)), bf2=n(ks[21], (1, H)),
        wfc_g=n(ks[22], (H, 1)), wfc_f=n(ks[23], (H, 1)), bfc=n(ks[24], (1, 1)),
    )


if __name__ == "__main__":
    key = jax.random.PRNGKey(0)
    N = 16                   # nodes in the (single) graph
    node_feature_dim = 8
    sigma_input_dim = 10
    hidden_dim = 32

    k_x, k_s, k_p = jax.random.split(key, 3)
    x = jax.random.normal(k_x, (N, node_feature_dim), dtype=jnp.float32)
    sigma = jax.random.normal(k_s, (1, sigma_input_dim), dtype=jnp.float32)

    # Deterministic small graph: undirected ring; PyG-style gcn_norm with self-loops.
    src = jnp.arange(N)
    dst = (src + 1) % N
    A = jnp.zeros((N, N), dtype=jnp.float32)
    A = A.at[src, dst].set(1.0).at[dst, src].set(1.0)
    A_hat = A + jnp.eye(N, dtype=jnp.float32)
    deg = jnp.sum(A_hat, axis=1)
    d_inv_sqrt = 1.0 / jnp.sqrt(deg)
    adj = d_inv_sqrt[:, None] * A_hat * d_inv_sqrt[None, :]

    params = make_params(k_p, node_feature_dim, sigma_input_dim, hidden_dim)

    # One-time init (kept OUT of the per-call jitted path, per perf review).
    prepare_params, forward = build_fusion_forward(
        N, node_feature_dim, sigma_input_dim, hidden_dim)
    slab = prepare_params(params)
    slab = jax.block_until_ready(slab)

    out = forward(adj, x, sigma, slab)
    out = jax.block_until_ready(out)

    ref = reference_jnp(adj, x, params, sigma)
    assert jnp.allclose(out, ref, rtol=1e-4, atol=1e-5), (out, ref)

    print("KERNEL_OK")
</pallas_src>

<mosaic_0001>
module attributes {stable_mosaic.version = 11 : i64} {
  func.func @kernel(%arg0: memref<16x16xf32, #tpu.memory_space<vmem>>, %arg1: memref<16x8xf32, #tpu.memory_space<vmem>>, %arg2: memref<1x10xf32, #tpu.memory_space<vmem>>, %arg3: memref<160x128xf32, #tpu.memory_space<vmem>>, %arg4: memref<1x128xf32, #tpu.memory_space<vmem>>) attributes {dimension_semantics = [], scalar_prefetch = 0 : i64, scratch_operands = 0 : i64, tpu.core_type = #tpu.core_type<tc>} {
    %c0 = arith.constant 0 : index
    %c0_0 = arith.constant 0 : index
    %0 = vector.load %arg0[%c0, %c0_0] : memref<16x16xf32, #tpu.memory_space<vmem>>, vector<16x16xf32>
    %c0_1 = arith.constant 0 : index
    %c0_2 = arith.constant 0 : index
    %1 = vector.load %arg3[%c0_1, %c0_2] : memref<160x128xf32, #tpu.memory_space<vmem>>, vector<8x32xf32>
    %c8 = arith.constant 8 : index
    %c0_3 = arith.constant 0 : index
    %2 = vector.load %arg3[%c8, %c0_3] : memref<160x128xf32, #tpu.memory_space<vmem>>, vector<32x32xf32>
    %c40 = arith.constant 40 : index
    %c0_4 = arith.constant 0 : index
    %3 = vector.load %arg3[%c40, %c0_4] : memref<160x128xf32, #tpu.memory_space<vmem>>, vector<32x32xf32>
    %c72 = arith.constant 72 : index
    %c0_5 = arith.constant 0 : index
    %4 = vector.load %arg3[%c72, %c0_5] : memref<160x128xf32, #tpu.memory_space<vmem>>, vector<10x64xf32>
    %c88 = arith.constant 88 : index
    %c0_6 = arith.constant 0 : index
    %5 = vector.load %arg3[%c88, %c0_6] : memref<160x128xf32, #tpu.memory_space<vmem>>, vector<64x32xf32>
    %c152 = arith.constant 152 : index
    %c0_7 = arith.constant 0 : index
    %6 = vector.load %arg3[%c152, %c0_7] : memref<160x128xf32, #tpu.memory_space<vmem>>, vector<1x32xf32>
    %c153 = arith.constant 153 : index
    %c0_8 = arith.constant 0 : index
    %7 = vector.load %arg3[%c153, %c0_8] : memref<160x128xf32, #tpu.memory_space<vmem>>, vector<1x32xf32>
    %c154 = arith.constant 154 : index
    %c0_9 = arith.constant 0 : index
    %8 = vector.load %arg3[%c154, %c0_9] : memref<160x128xf32, #tpu.memory_space<vmem>>, vector<1x32xf32>
    %c155 = arith.constant 155 : index
    %c0_10 = arith.constant 0 : index
    %9 = vector.load %arg3[%c155, %c0_10] : memref<160x128xf32, #tpu.memory_space<vmem>>, vector<1x64xf32>
    %c156 = arith.constant 156 : index
    %c0_11 = arith.constant 0 : index
    %10 = vector.load %arg3[%c156, %c0_11] : memref<160x128xf32, #tpu.memory_space<vmem>>, vector<1x32xf32>
    %c157 = arith.constant 157 : index
    %c0_12 = arith.constant 0 : index
    %11 = vector.load %arg3[%c157, %c0_12] : memref<160x128xf32, #tpu.memory_space<vmem>>, vector<1x32xf32>
    %c158 = arith.constant 158 : index
    %c0_13 = arith.constant 0 : index
    %12 = vector.load %arg3[%c158, %c0_13] : memref<160x128xf32, #tpu.memory_space<vmem>>, vector<1x32xf32>
    %c159 = arith.constant 159 : index
    %c0_14 = arith.constant 0 : index
    %13 = vector.load %arg3[%c159, %c0_14] : memref<160x128xf32, #tpu.memory_space<vmem>>, vector<1x32xf32>
    %c0_15 = arith.constant 0 : index
    %c0_16 = arith.constant 0 : index
    %14 = vector.load %arg1[%c0_15, %c0_16] : memref<16x8xf32, #tpu.memory_space<vmem>>, vector<16x8xf32>
    %cst = arith.constant dense<0.000000e+00> : vector<16x32xf32>
    %15 = tpu.matmul %14, %1, %cst {dimension_numbers = #tpu.dot_dimension_numbers<[1], [0], [0], [1], [0, 0, 1, 1], [], []>} : vector<16x8xf32>, vector<8x32xf32>, vector<16x32xf32> -> vector<16x32xf32>
    %cst_17 = arith.constant dense<0.000000e+00> : vector<16x32xf32>
    %16 = tpu.matmul %0, %15, %cst_17 {dimension_numbers = #tpu.dot_dimension_numbers<[1], [0], [0], [1], [0, 0, 1, 1], [], []>} : vector<16x16xf32>, vector<16x32xf32>, vector<16x32xf32> -> vector<16x32xf32>
    %17 = vector.broadcast %6 : vector<1x32xf32> to vector<16x32xf32>
    %18 = arith.addf %16, %17 : vector<16x32xf32>
    %cst_18 = arith.constant 0.000000e+00 : f32
    %19 = vector.broadcast %cst_18 : f32 to vector<16x32xf32>
    %20 = arith.maximumf %18, %19 : vector<16x32xf32>
    %cst_19 = arith.constant dense<0.000000e+00> : vector<16x32xf32>
    %21 = tpu.matmul %20, %2, %cst_19 {dimension_numbers = #tpu.dot_dimension_numbers<[1], [0], [0], [1], [0, 0, 1, 1], [], []>} : vector<16x32xf32>, vector<32x32xf32>, vector<16x32xf32> -> vector<16x32xf32>
    %cst_20 = arith.constant dense<0.000000e+00> : vector<16x32xf32>
    %22 = tpu.matmul %0, %21, %cst_20 {dimension_numbers = #tpu.dot_dimension_numbers<[1], [0], [0], [1], [0, 0, 1, 1], [], []>} : vector<16x16xf32>, vector<16x32xf32>, vector<16x32xf32> -> vector<16x32xf32>
    %23 = vector.broadcast %7 : vector<1x32xf32> to vector<16x32xf32>
    %24 = arith.addf %22, %23 : vector<16x32xf32>
    %25 = arith.addf %24, %20 : vector<16x32xf32>
    %cst_21 = arith.constant 0.000000e+00 : f32
    %26 = vector.broadcast %cst_21 : f32 to vector<16x32xf32>
    %27 = arith.maximumf %25, %26 : vector<16x32xf32>
    %cst_22 = arith.constant dense<0.000000e+00> : vector<16x32xf32>
    %28 = tpu.matmul %27, %3, %cst_22 {dimension_numbers = #tpu.dot_dimension_numbers<[1], [0], [0], [1], [0, 0, 1, 1], [], []>} : vector<16x32xf32>, vector<32x32xf32>, vector<16x32xf32> -> vector<16x32xf32>
    %cst_23 = arith.constant dense<0.000000e+00> : vector<16x32xf32>
    %29 = tpu.matmul %0, %28, %cst_23 {dimension_numbers = #tpu.dot_dimension_numbers<[1], [0], [0], [1], [0, 0, 1, 1], [], []>} : vector<16x16xf32>, vector<16x32xf32>, vector<16x32xf32> -> vector<16x32xf32>
    %30 = vector.broadcast %8 : vector<1x32xf32> to vector<16x32xf32>
    %31 = arith.addf %29, %30 : vector<16x32xf32>
    %cst_24 = arith.constant 0.000000e+00 : f32
    %32 = vector.broadcast %cst_24 : f32 to vector<16x32xf32>
    %33 = arith.maximumf %31, %32 : vector<16x32xf32>
    %cst_25 = arith.constant dense<0.000000e+00> : vector<32xf32>
    %34 = vector.multi_reduction <add>, %33, %cst_25 [0] : vector<16x32xf32> to vector<32xf32>
    %35 = vector.shape_cast %34 : vector<32xf32> to vector<1x32xf32>
    %c0_26 = arith.constant 0 : index
    %c0_27 = arith.constant 0 : index
    %36 = vector.load %arg2[%c0_26, %c0_27] : memref<1x10xf32, #tpu.memory_space<vmem>>, vector<1x10xf32>
    %cst_28 = arith.constant dense<0.000000e+00> : vector<1x64xf32>
    %37 = tpu.matmul %36, %4, %cst_28 {dimension_numbers = #tpu.dot_dimension_numbers<[1], [0], [0], [1], [0, 0, 1, 1], [], []>} : vector<1x10xf32>, vector<10x64xf32>, vector<1x64xf32> -> vector<1x64xf32>
    %38 = arith.addf %37, %9 : vector<1x64xf32>
    %cst_29 = arith.constant 0.000000e+00 : f32
    %39 = vector.broadcast %cst_29 : f32 to vector<1x64xf32>
    %40 = arith.maximumf %38, %39 : vector<1x64xf32>
    %cst_30 = arith.constant dense<0.000000e+00> : vector<1x32xf32>
    %41 = tpu.matmul %40, %5, %cst_30 {dimension_numbers = #tpu.dot_dimension_numbers<[1], [0], [0], [1], [0, 0, 1, 1], [], []>} : vector<1x64xf32>, vector<64x32xf32>, vector<1x32xf32> -> vector<1x32xf32>
    %42 = arith.addf %41, %10 : vector<1x32xf32>
    %cst_31 = arith.constant 0.000000e+00 : f32
    %43 = vector.broadcast %cst_31 : f32 to vector<1x32xf32>
    %44 = arith.maximumf %42, %43 : vector<1x32xf32>
    %45 = arith.mulf %35, %11 : vector<1x32xf32>
    %46 = arith.mulf %44, %12 : vector<1x32xf32>
    %47 = arith.addf %45, %46 : vector<1x32xf32>
    %48 = arith.addf %47, %13 : vector<1x32xf32>
    %cst_32 = arith.constant dense<0.000000e+00> : vector<1xf32>
    %49 = vector.multi_reduction <add>, %48, %cst_32 [1] : vector<1x32xf32> to vector<1xf32>
    %50 = vector.shape_cast %49 : vector<1xf32> to vector<1x1xf32>
    %51 = vector.shape_cast %50 : vector<1x1xf32> to vector<1x1xf32>
    %52 = vector.broadcast %51 : vector<1x1xf32> to vector<1x128xf32>
    %c0_33 = arith.constant 0 : index
    %c0_34 = arith.constant 0 : index
    %53 = vector.load %arg4[%c0_33, %c0_34] : memref<1x128xf32, #tpu.memory_space<vmem>>, vector<1x128xf32>
    tpu.vector_store %arg4[%c0_33, %c0_34], %52 {strides = array<i32>} : memref<1x128xf32, #tpu.memory_space<vmem>>, vector<1x128xf32>,
    return
  }
}

</mosaic_0001>

<llo_original>
// kernel: forward.1
$region0: #{forward.1}
  #allocation0 [shape = 'u32[]', space=smem, size = 0x4, offset = 0x4, fixed_abs, tag = 'smem constant byte address 0x4 - core index']
  #allocation1 [shape = 'u32[72,128]{1,0:T(1,128)}', space=vmem, size = 0x9000, scoped, tag = 'internal scratch']
  %s0 = inlined_call_operand.vmem [shape: f32[16,16], index: 0, kind: input, shape index: {}]
  %s1 = inlined_call_operand.vmem [shape: f32[16,8], index: 1, kind: input, shape index: {}]
  %s2 = inlined_call_operand.vmem [shape: f32[1,10], index: 2, kind: input, shape index: {}]
  %s3 = inlined_call_operand.hbm [shape: f32[160,128], index: 3, kind: input, shape index: {}]
  %s4 = inlined_call_operand.hbm [shape: f32[1,128], index: 4, kind: output, shape index: {}]
  %s5 = sld [smem:[#allocation0]]
  $region30: #{forward.1} parent=0
    _
  %s7 = ssub.s32 1, %s5
  %s8 = scalar_select 0, %s7, %s5
  $region1: #{forward.1} parent=0
    #allocation2 [shape = 'u8[81920]{0}', space=vmem, size = 0x14000, scoped, tag = 'input window, operand 3, single buffered']
    #allocation3 [shape = 's32[1]{0}', space=sflag, size = 0x4, scoped, tag = 'scoped memory for forward.1']
    #allocation4 [shape = 's32[1]{0}', space=sflag, size = 0x4, scoped, tag = 'scoped memory for forward.1']
    #allocation5 [shape = 'u8[512]{0}', space=vmem, size = 0x400, scoped, tag = 'output window, operand 0, single buffered']
    %9 = vsyncpa [#allocation3], 0
    %10 = vsyncpa [#allocation4], 0
    // Predicated region
    $region2: #{forward.1} parent=1 // pred_check
      _
    $region3: #{forward.1} parent=1 // pred_check_branch
      %12 = sbr.rel (0) target = $region5
    $region4: #{forward.1} parent=1 // pred_region
      _
    $region5: #{forward.1} parent=1 // pred_fallthru
      _
    // Predicated region
    $region6: #{forward.1} parent=1 // pred_check
      _
    $region7: #{forward.1} parent=1 // pred_check_branch
      %14 = sbr.rel (0) target = $region9
    $region8: #{forward.1} parent=1 // pred_region
      _
    $region9: #{forward.1} parent=1 // pred_fallthru
      _
    // Predicated region
    $region10: #{forward.1} parent=1 // pred_check
      _
    $region11: #{forward.1} parent=1 // pred_check_branch
      %16 = sbr.rel (0) target = $region13
    $region12: #{forward.1} parent=1 // pred_region
      _
    $region13: #{forward.1} parent=1 // pred_fallthru
      _
    // Predicated region
    $region14: #{forward.1} parent=1 // pred_check
      _
    $region15: #{forward.1} parent=1 // pred_check_branch
      %18 = sbr.rel (0) target = $region17
    $region16: #{forward.1} parent=1 // pred_region
      %20 = vsyncadd [#allocation3], 0
      %s21 = sshll.u32 %s3, 4
      %s22 = int_to_ptr.hbm [resolvable:$true] %s21
      %s23 = sshll.u32 [#allocation2], 4
      %s24 = int_to_ptr.vmem [resolvable:$true] %s23
      %29 = dma.hbm_to_vmem [thread:$0]  %s22, 2560, %s24, [#allocation3], 128, 128, 8
    $region17: #{forward.1} parent=1 // pred_fallthru
      _
    // Predicated region
    $region18: #{forward.1} parent=1 // pred_check
      _
    $region19: #{forward.1} parent=1 // pred_check_branch
      %31 = sbr.rel (0) target = $region21
    $region20: #{forward.1} parent=1 // pred_region
      %33 = dma.done [#allocation3], 2560
    $region21: #{forward.1} parent=1 // pred_fallthru
      _
    %v34 = vld [vmem:[%s0] sm:$0xff]
    %v35 = vld [vmem:[%s0 + $0x8] sm:$0xff]
    %v36 = vld [vmem:[#allocation2] sm:$0xff]
    %v37 = vld [vmem:[#allocation2 + $0x8] sm:$0xff]
    %v38 = vld [vmem:[#allocation2 + $0x10] sm:$0xff]
    %v39 = vld [vmem:[#allocation2 + $0x18] sm:$0xff]
    %v40 = vld [vmem:[#allocation2 + $0x20] sm:$0xff]
    %v41 = vld [vmem:[#allocation2 + $0x28] sm:$0xff]
    %v42 = vld [vmem:[#allocation2 + $0x30] sm:$0xff]
    %v43 = vld [vmem:[#allocation2 + $0x38] sm:$0xff]
    %v44 = vld [vmem:[#allocation2 + $0x40] sm:$0xff]
    %v45 = vld [vmem:[#allocation2 + $0x48] sm:$0xff]
    %v46 = vld [vmem:[#allocation2 + $0x50] sm:$0x3]
    %v47 = vld [vmem:[#allocation2 + $0x58] sm:$0xff]
    %v48 = vld [vmem:[#allocation2 + $0x60] sm:$0xff]
    %v49 = vld [vmem:[#allocation2 + $0x68] sm:$0xff]
    %v50 = vld [vmem:[#allocation2 + $0x70] sm:$0xff]
    %v51 = vld [vmem:[#allocation2 + $0x78] sm:$0xff]
    %v52 = vld [vmem:[#allocation2 + $0x80] sm:$0xff]
    %v53 = vld [vmem:[#allocation2 + $0x88] sm:$0xff]
    %v54 = vld [vmem:[#allocation2 + $0x90] sm:$0xff]
    %v55 = vld [vmem:[#allocation2 + $0x98] sm:$0x1]
    %v56 = vld [vmem:[#allocation2 + $0x99] sm:$0x1]
    %v57 = vld [vmem:[#allocation2 + $0x9a] sm:$0x1]
    %v58 = vld [vmem:[#allocation2 + $0x9b] sm:$0x1]
    %v59 = vld [vmem:[#allocation2 + $0x9c] sm:$0x1]
    %v60 = vld [vmem:[#allocation2 + $0x9d] sm:$0x1]
    %v61 = vld [vmem:[#allocation2 + $0x9e] sm:$0x1]
    %v62 = vld [vmem:[#allocation2 + $0x9f] sm:$0x1]
    %v63 = vld [vmem:[%s1] sm:$0xff]
    %v64 = vld [vmem:[%s1 + $0x8] sm:$0xff]
    %vm65 = vcmask 64512
    %v67 = vsel %vm65, %v63, 0
    %v70 = vsel %vm65, %v64, 0
    %72 = vmatpush.msra.mxu0 0.0
    %73 = vmatpush.msra.mxu0 0.0
    %74 = vmatpush.msra.mxu0 0.0
    %75 = vmatpush.msra.mxu0 0.0
    %76 = vmatpush.msra.mxu0 0.0
    %77 = vmatpush.msra.mxu0 0.0
    %78 = vmatpush.msra.mxu0 0.0
    %79 = vmatpush.msra.mxu0 0.0
    %80 = vmatpush.msra.mxu0 0.0
    %81 = vmatpush.msra.mxu0 0.0
    %82 = vmatpush.msra.mxu0 0.0
    %83 = vmatpush.msra.mxu0 0.0
    %84 = vmatpush.msra.mxu0 0.0
    %85 = vmatpush.msra.mxu0 0.0
    %86 = vmatpush.msra.mxu0 0.0
    %87 = vmatpush.msra.mxu0 %v36
    %88 = vmatmul.f32.gmra.mxu0 %v67
    %v89 = vpop.f32.mrf.mxu0
    %v90 = vadd.f32 0.0, %v89
    %91 = vmatmul.f32.gmra.mxu0 %v70
    %v92 = vpop.f32.mrf.mxu0
    %v93 = vadd.f32 0.0, %v92
    %94 = vdwg.mxu0
    %v95 = vperm.slane %v55, 0
    %vm96 = vcmask 130048
    %v98 = vsel %vm96, %v34, 0
    %v101 = vsel %vm96, %v35, 0
    %103 = vmatpush.msra.mxu0 0.0
    %104 = vmatpush.msra.mxu0 0.0
    %105 = vmatpush.msra.mxu0 0.0
    %106 = vmatpush.msra.mxu0 0.0
    %107 = vmatpush.msra.mxu0 0.0
    %108 = vmatpush.msra.mxu0 0.0
    %109 = vmatpush.msra.mxu0 0.0
    %110 = vmatpush.msra.mxu0 0.0
    %111 = vmatpush.msra.mxu0 0.0
    %112 = vmatpush.msra.mxu0 0.0
    %113 = vmatpush.msra.mxu0 0.0
    %114 = vmatpush.msra.mxu0 0.0
    %115 = vmatpush.msra.mxu0 0.0
    %116 = vmatpush.msra.mxu0 0.0
    %117 = vmatpush.msra.mxu0 %v93
    %118 = vmatpush.msra.mxu0 %v90
    %119 = vmatmul.f32.gmra.mxu0 %v98
    %v120 = vpop.f32.mrf.mxu0
    %v121 = vadd.f32 %v95, %v120
    %122 = vmatmul.f32.gmra.mxu0 %v101
    %v123 = vpop.f32.mrf.mxu0
    %v124 = vadd.f32 %v95, %v123
    %125 = vdwg.mxu0
    %v126 = vmax.f32 %v121, 0.0
    %v127 = vmax.f32 %v124, 0.0
    %vm128 = vcmask 261120
    %v130 = vsel %vm128, %v126, 0
    %v133 = vsel %vm128, %v127, 0
    %135 = vmatpush.msra.mxu0 0.0
    %136 = vmatpush.msra.mxu0 0.0
    %137 = vmatpush.msra.mxu0 0.0
    %138 = vmatpush.msra.mxu0 0.0
    %139 = vmatpush.msra.mxu0 0.0
    %140 = vmatpush.msra.mxu0 0.0
    %141 = vmatpush.msra.mxu0 0.0
    %142 = vmatpush.msra.mxu0 0.0
    %143 = vmatpush.msra.mxu0 0.0
    %144 = vmatpush.msra.mxu0 0.0
    %145 = vmatpush.msra.mxu0 0.0
    %146 = vmatpush.msra.mxu0 0.0
    %147 = vmatpush.msra.mxu0 %v40
    %148 = vmatpush.msra.mxu0 %v39
    %149 = vmatpush.msra.mxu0 %v38
    %150 = vmatpush.msra.mxu0 %v37
    %151 = vmatmul.f32.gmra.mxu0 %v130
    %v152 = vpop.f32.mrf.mxu0
    %v153 = vadd.f32 0.0, %v152
    %154 = vmatmul.f32.gmra.mxu0 %v133
    %v155 = vpop.f32.mrf.mxu0
    %v156 = vadd.f32 0.0, %v155
    %157 = vdwg.mxu0
    %v158 = vperm.slane %v56, 0
    %159 = vmatpush.msra.mxu0 0.0
    %160 = vmatpush.msra.mxu0 0.0
    %161 = vmatpush.msra.mxu0 0.0
    %162 = vmatpush.msra.mxu0 0.0
    %163 = vmatpush.msra.mxu0 0.0
    %164 = vmatpush.msra.mxu0 0.0
    %165 = vmatpush.msra.mxu0 0.0
    %166 = vmatpush.msra.mxu0 0.0
    %167 = vmatpush.msra.mxu0 0.0
    %168 = vmatpush.msra.mxu0 0.0
    %169 = vmatpush.msra.mxu0 0.0
    %170 = vmatpush.msra.mxu0 0.0
    %171 = vmatpush.msra.mxu0 0.0
    %172 = vmatpush.msra.mxu0 0.0
    %173 = vmatpush.msra.mxu0 %v156
    %174 = vmatpush.msra.mxu0 %v153
    %175 = vmatmul.f32.gmra.mxu0 %v98
    %v176 = vpop.f32.mrf.mxu0
    %v177 = vadd.f32 %v158, %v176
    %178 = vmatmul.f32.gmra.mxu0 %v101
    %v179 = vpop.f32.mrf.mxu0
    %v180 = vadd.f32 %v158, %v179
    %181 = vdwg.mxu0
    %v182 = vadd.f32 %v177, %v126
    %v183 = vadd.f32 %v180, %v127
    %v184 = vmax.f32 %v182, 0.0
    %v185 = vmax.f32 %v183, 0.0
    %v187 = vsel %vm128, %v184, 0
    %v190 = vsel %vm128, %v185, 0
    %192 = vmatpush.msra.mxu0 0.0
    %193 = vmatpush.msra.mxu0 0.0
    %194 = vmatpush.msra.mxu0 0.0
    %195 = vmatpush.msra.mxu0 0.0
    %196 = vmatpush.msra.mxu0 0.0
    %197 = vmatpush.msra.mxu0 0.0
    %198 = vmatpush.msra.mxu0 0.0
    %199 = vmatpush.msra.mxu0 0.0
    %200 = vmatpush.msra.mxu0 0.0
    %201 = vmatpush.msra.mxu0 0.0
    %202 = vmatpush.msra.mxu0 0.0
    %203 = vmatpush.msra.mxu0 0.0
    %204 = vmatpush.msra.mxu0 %v44
    %205 = vmatpush.msra.mxu0 %v43
    %206 = vmatpush.msra.mxu0 %v42
    %207 = vmatpush.msra.mxu0 %v41
    %208 = vmatmul.f32.gmra.mxu0 %v187
    %v209 = vpop.f32.mrf.mxu0
    %v210 = vadd.f32 0.0, %v209
    %211 = vmatmul.f32.gmra.mxu0 %v190
    %v212 = vpop.f32.mrf.mxu0
    %v213 = vadd.f32 0.0, %v212
    %214 = vdwg.mxu0
    %v215 = vperm.slane %v57, 0
    %216 = vmatpush.msra.mxu0 0.0
    %217 = vmatpush.msra.mxu0 0.0
    %218 = vmatpush.msra.mxu0 0.0
    %219 = vmatpush.msra.mxu0 0.0
    %220 = vmatpush.msra.mxu0 0.0
    %221 = vmatpush.msra.mxu0 0.0
    %222 = vmatpush.msra.mxu0 0.0
    %223 = vmatpush.msra.mxu0 0.0
    %224 = vmatpush.msra.mxu0 0.0
    %225 = vmatpush.msra.mxu0 0.0
    %226 = vmatpush.msra.mxu0 0.0
    %227 = vmatpush.msra.mxu0 0.0
    %228 = vmatpush.msra.mxu0 0.0
    %229 = vmatpush.msra.mxu0 0.0
    %230 = vmatpush.msra.mxu0 %v213
    %231 = vmatpush.msra.mxu0 %v210
    %232 = vmatmul.f32.gmra.mxu0 %v98
    %v233 = vpop.f32.mrf.mxu0
    %v234 = vadd.f32 %v215, %v233
    %235 = vmatmul.f32.gmra.mxu0 %v101
    %v236 = vpop.f32.mrf.mxu0
    %v237 = vadd.f32 %v215, %v236
    %238 = vdwg.mxu0
    %v239 = vmax.f32 %v234, 0.0
    %v240 = vmax.f32 %v237, 0.0
    %v241 = vsel %vm128, %v239, 0.0
    %v242 = vsel %vm128, %v240, 0.0
    %v243 = vadd.f32 %v241, %v242
    %v244 = vrot.slane %v243, 4
    %v245 = vadd.f32 %v243, %v244
    %v246 = vrot.slane %v245, 2
    %v247 = vadd.f32 %v245, %v246
    %v248 = vrot.slane %v247, 1
    %v249 = vadd.f32 %v247, %v248
    %v250 = vld [vmem:[%s2] sm:$0x1]
    %vm251 = vcmask 80896
    %v253 = vsel %vm251, %v250, 0
    %vm255 = vcmask 1041408
    %v257 = vsel %vm255, %v46, 0
    %259 = vmatpush.msra.mxu0 0.0
    %260 = vmatpush.msra.mxu0 0.0
    %261 = vmatpush.msra.mxu0 0.0
    %262 = vmatpush.msra.mxu0 0.0
    %263 = vmatpush.msra.mxu0 0.0
    %264 = vmatpush.msra.mxu0 0.0
    %265 = vmatpush.msra.mxu0 0.0
    %266 = vmatpush.msra.mxu0 0.0
    %267 = vmatpush.msra.mxu0 0.0
    %268 = vmatpush.msra.mxu0 0.0
    %269 = vmatpush.msra.mxu0 0.0
    %270 = vmatpush.msra.mxu0 0.0
    %271 = vmatpush.msra.mxu0 0.0
    %272 = vmatpush.msra.mxu0 0.0
    %273 = vmatpush.msra.mxu0 %v257
    %274 = vmatpush.msra.mxu0 %v45
    %275 = vmatmul.f32.gmra.mxu0 %v253
    %v276 = vpop.f32.mrf.mxu0
    %v277 = vadd.f32 %v58, %v276
    %278 = vdwg.mxu0
    %v279 = vmax.f32 %v277, 0.0
    %vm280 = vcmask 523264
    %v282 = vsel %vm280, %v279, 0
    %284 = vmatpush.msra.mxu0 0.0
    %285 = vmatpush.msra.mxu0 0.0
    %286 = vmatpush.msra.mxu0 0.0
    %287 = vmatpush.msra.mxu0 0.0
    %288 = vmatpush.msra.mxu0 0.0
    %289 = vmatpush.msra.mxu0 0.0
    %290 = vmatpush.msra.mxu0 0.0
    %291 = vmatpush.msra.mxu0 0.0
    %292 = vmatpush.msra.mxu0 %v54
    %293 = vmatpush.msra.mxu0 %v53
    %294 = vmatpush.msra.mxu0 %v52
    %295 = vmatpush.msra.mxu0 %v51
    %296 = vmatpush.msra.mxu0 %v50
    %297 = vmatpush.msra.mxu0 %v49
    %298 = vmatpush.msra.mxu0 %v48
    %299 = vmatpush.msra.mxu0 %v47
    %300 = vmatmul.f32.gmra.mxu0 %v282
    %v301 = vpop.f32.mrf.mxu0
    %v302 = vadd.f32 %v59, %v301
    %303 = vdwg.mxu0
    %v304 = vmax.f32 %v302, 0.0
    %v305 = vmul.f32 %v249, %v60
    %v306 = vmul.f32 %v304, %v61
    %v307 = vadd.f32 %v305, %v306
    %v308 = vadd.f32 %v307, %v62
    %vm309 = vcmask 253952
    %v310 = vsel %vm309, %v308, 0.0
    %311 = vadd.xlane.f32.xlu0 %v310
    %v312 = vpop.xlane.xlu0 %311
    %313 = vst [vmem:[#allocation5] sm:$0x1] %v312
    // Predicated region
    $region22: #{forward.1} parent=1 // pred_check
      _
    $region23: #{forward.1} parent=1 // pred_check_branch
      %315 = sbr.rel (0) target = $region25
    $region24: #{forward.1} parent=1 // pred_region
      %317 = vsyncadd [#allocation4], 0
      %s319 = sshll.u32 [#allocation5], 4
      %s320 = int_to_ptr.vmem [resolvable:$true] %s319
      %s321 = sshll.u32 %s4, 4
      %s322 = int_to_ptr.hbm [resolvable:$true] %s321
      %324 = dma.vmem_to_hbm [thread:$0]  %s320, 16, %s322, [#allocation4]
    $region25: #{forward.1} parent=1 // pred_fallthru
      _
    // Predicated region
    $region26: #{forward.1} parent=1 // pred_check
      _
    $region27: #{forward.1} parent=1 // pred_check_branch
      %326 = sbr.rel (0) target = $region29
    $region28: #{forward.1} parent=1 // pred_region
      %328 = dma.done [#allocation4], 16
    $region29: #{forward.1} parent=1 // pred_fallthru
      _
    %329 = vsyncpa [#allocation3], 1
    %330 = vsyncpa [#allocation4], 1

</llo_original>
